<compile_context>
chip_gen: v7x
topology: tpu7x:2x2x1
jax: 0.10.0
libtpu: 0.0.40
codegen_flags: <defaults>
</compile_context>

<pallas_src>
import jax
import jax.numpy as jnp
from jax.experimental import pallas as pl
from jax.experimental.pallas import tpu as pltpu

SEQ = 3
HIDDEN = 16
INPUT = 1


def _sigmoid(x):
    # tanh-form sigmoid: one EUP pass (tanh) + cheap VALU ops.  The EUP has a
    # single bundle slot and is the binding unit for this kernel, while the
    # 4 VALU slots are underused.
    return 0.5 * jnp.tanh(0.5 * x) + 0.5


def lstm_kernel(x_ref, whh_ref, wib_ref, wlin_ref, blin_ref, out_ref):
    """One batch tile; batch lives on the lane axis.

    x_ref   : (SEQ, TB)   VMEM  inputs (input_size=1 squeezed), batch on lanes
    whh_ref : (4H, H)     VMEM  PyTorch weight_hh_l0
    wib_ref : (4H, 2)     VMEM  col 0 = weight_ih_l0[:, 0], col 1 = b_ih + b_hh
    wlin_ref: (SEQ*H, 1)  VMEM  Linear weight transposed
    blin_ref: (1,)        SMEM  Linear bias scalar
    out_ref : (1, TB)     VMEM  lane-dense output slab
    """
    H = HIDDEN
    TB = x_ref.shape[1]
    whh = whh_ref[...]                                          # (4H, H)

    # Hoist the column->lane broadcasts once (JAX does not CSE broadcast_in_dim;
    # leaving them inline would re-emit them every timestep).
    w_ih_b = jnp.broadcast_to(wib_ref[:, 0:1], (4 * H, TB))     # (4H, TB)
    bias_b = jnp.broadcast_to(wib_ref[:, 1:2], (4 * H, TB))     # (4H, TB)
    wlin_b = [jnp.broadcast_to(wlin_ref[t * H:(t + 1) * H, :], (H, TB))
              for t in range(SEQ)]                              # 3 x (H, TB)

    h = None
    c = None
    acc = None
    for t in range(SEQ):                                        # static unroll, SEQ = 3
        # Input contribution computed per step (only the current t is live, so
        # no spilled (4H, TB) live ranges at large TB).  It does not depend on
        # h, so the scheduler still overlaps it with the MXU matmul.
        xwb = w_ih_b * x_ref[t:t + 1, :] + bias_b               # (4H, TB)
        if t == 0:
            # nn.LSTM default h0 = c0 = 0: skip the recurrent matmul and the
            # forget gate entirely (c = i * g).  Only valid for zero init state.
            gates = xwb
            i_g = _sigmoid(gates[0:H, :])
            g_g = jnp.tanh(gates[2 * H:3 * H, :])
            o_g = _sigmoid(gates[3 * H:4 * H, :])
            c = i_g * g_g
        else:
            gates = jnp.dot(whh, h, preferred_element_type=jnp.float32) + xwb
            # PyTorch gate order [i, f, g, o]; 16-row sublane slices (8-aligned).
            i_g = _sigmoid(gates[0:H, :])
            f_g = _sigmoid(gates[H:2 * H, :])
            g_g = jnp.tanh(gates[2 * H:3 * H, :])
            o_g = _sigmoid(gates[3 * H:4 * H, :])
            c = f_g * c + i_g * g_g
        h = o_g * jnp.tanh(c)
        # Fused Linear(48, 1): out[b] = sum_t sum_k h_t[k, b] * W_lin[0, t*H + k]
        contrib = h * wlin_b[t]                                 # (H, TB)
        acc = contrib if t == 0 else acc + contrib

    out_ref[...] = jnp.sum(acc, axis=0, keepdims=True) + blin_ref[0]   # (1, TB)


def _choose_tile(batch, tb_max):
    """Largest lane-dense tile <= tb_max (multiple of 128) that still leaves
    >= 2 grid steps when possible, so both v7x TensorCores get work."""
    b128 = ((max(batch, 1) + 127) // 128) * 128
    half = ((b128 // 2 + 127) // 128) * 128
    return max(128, min(tb_max, half))


def lstm_forward(x, params, tb=None, tb_max=1024):
    """x: (B, SEQ, 1) float32  ->  (B, 1) float32."""
    B = x.shape[0]
    H = HIDDEN
    if tb is None:
        tb = _choose_tile(B, tb_max)
    assert tb % 128 == 0

    # Batch-on-lanes layout for the kernel.  XLA fuses reshape+transpose+pad
    # into a single copy of the tiny (SEQ, B) slab.
    # TODO(synk): producing x in (SEQ, B) layout upstream would remove this copy.
    x2 = x.reshape(B, SEQ).astype(jnp.float32).T                # (SEQ, B)
    b_pad = pl.cdiv(B, tb) * tb
    if b_pad != B:
        x2 = jnp.pad(x2, ((0, 0), (0, b_pad - B)))              # tail padding

    # Tiny-parameter repack (host side): [W_ih | b_ih + b_hh] as one (4H, 2).
    wib = jnp.concatenate(
        [params["w_ih"].astype(jnp.float32),                               # (4H, 1)
         (params["b_ih"] + params["b_hh"]).astype(jnp.float32)[:, None]],  # (4H, 1)
        axis=1)                                                            # (4H, 2)
    wlin = params["w_lin"].astype(jnp.float32).T                           # (SEQ*H, 1)
    blin = params["b_lin"].astype(jnp.float32).reshape((1,))               # (1,)

    # Advisory cost so XLA schedules around this very cheap custom call.
    cost = pl.CostEstimate(
        flops=2 * (SEQ - 1) * (4 * H) * H * b_pad + 30 * (4 * H) * b_pad,
        transcendentals=(5 * SEQ - 1) * H * b_pad,
        bytes_accessed=(SEQ + 1) * 4 * b_pad,
    )

    out = pl.pallas_call(
        lstm_kernel,
        out_shape=jax.ShapeDtypeStruct((1, b_pad), jnp.float32),
        grid=(b_pad // tb,),
        in_specs=[
            pl.BlockSpec((SEQ, tb), lambda i: (0, i)),                 # x tile
            pl.BlockSpec((4 * H, H), lambda i: (0, 0)),                # W_hh
            pl.BlockSpec((4 * H, 2), lambda i: (0, 0)),                # [W_ih | bias]
            pl.BlockSpec((SEQ * H, 1), lambda i: (0, 0)),              # W_lin^T
            pl.BlockSpec(memory_space=pltpu.MemorySpace.SMEM),         # b_lin scalar
        ],
        out_specs=pl.BlockSpec((1, tb), lambda i: (0, i)),             # lane-dense out
        compiler_params=pltpu.CompilerParams(
            dimension_semantics=("parallel",),                         # megacore on v7x
            vmem_limit_bytes=32 * 1024 * 1024),                        # headroom on v5e
        cost_estimate=cost,
    )(x2, params["w_hh"].astype(jnp.float32), wib, wlin, blin)

    return out[0, :B][:, None]                                          # (B, 1)


def init_params(key):
    """Deterministic synthetic init, PyTorch-style uniform(-1/sqrt(fan), 1/sqrt(fan))."""
    k_lstm = 1.0 / jnp.sqrt(jnp.float32(HIDDEN))
    k_lin = 1.0 / jnp.sqrt(jnp.float32(HIDDEN * SEQ))
    ks = jax.random.split(key, 6)
    u = lambda k, shape, lim: jax.random.uniform(k, shape, jnp.float32, -lim, lim)
    return {
        "w_ih": u(ks[0], (4 * HIDDEN, INPUT), k_lstm),     # PyTorch weight_ih_l0
        "w_hh": u(ks[1], (4 * HIDDEN, HIDDEN), k_lstm),    # PyTorch weight_hh_l0
        "b_ih": u(ks[2], (4 * HIDDEN,), k_lstm),
        "b_hh": u(ks[3], (4 * HIDDEN,), k_lstm),
        "w_lin": u(ks[4], (1, HIDDEN * SEQ), k_lin),       # PyTorch Linear.weight
        "b_lin": u(ks[5], (1,), k_lin),
    }


def reference_forward(x, params):
    """Pure-JAX reference reproducing torch.nn.LSTM + Linear semantics."""
    B = x.shape[0]
    hi = jax.lax.Precision.HIGHEST
    xs = x.reshape(B, SEQ).astype(jnp.float32)
    h = jnp.zeros((B, HIDDEN), jnp.float32)
    c = jnp.zeros((B, HIDDEN), jnp.float32)
    w_ih_t = params["w_ih"].T                        # (1, 4H)
    w_hh_t = params["w_hh"].T                        # (H, 4H)
    bias = params["b_ih"] + params["b_hh"]
    outs = []
    for t in range(SEQ):
        x_t = xs[:, t][:, None]
        g = (jnp.dot(x_t, w_ih_t, precision=hi)
             + jnp.dot(h, w_hh_t, precision=hi) + bias)
        i = jax.nn.sigmoid(g[:, 0:HIDDEN])
        f = jax.nn.sigmoid(g[:, HIDDEN:2 * HIDDEN])
        gg = jnp.tanh(g[:, 2 * HIDDEN:3 * HIDDEN])
        o = jax.nn.sigmoid(g[:, 3 * HIDDEN:4 * HIDDEN])
        c = f * c + i * gg
        h = o * jnp.tanh(c)
        outs.append(h)
    feat = jnp.concatenate(outs, axis=1)             # (B, SEQ*H) == reshape(-1, 48)
    return jnp.dot(feat, params["w_lin"].T, precision=hi) + params["b_lin"]


if __name__ == "__main__":
    key = jax.random.PRNGKey(0)
    k_x, k_x2, k_p = jax.random.split(key, 3)
    params = init_params(k_p)

    # Small batch (single-tile path, grid = (1,)).
    B = 8
    x = jax.random.normal(k_x, (B, SEQ, INPUT), jnp.float32)   # (batch, seq, input_size)
    out = jax.block_until_ready(lstm_forward(x, params))
    ref = reference_forward(x, params)
    assert out.shape == (B, 1), out.shape
    assert jnp.allclose(out, ref, atol=5e-4, rtol=5e-4), (out, ref)

    # Batch spanning more than one tile (adaptive tb -> grid = (2,), parallel axis exercised).
    B2 = 300
    x2 = jax.random.normal(k_x2, (B2, SEQ, INPUT), jnp.float32)
    out2 = jax.block_until_ready(lstm_forward(x2, params))
    ref2 = reference_forward(x2, params)
    assert out2.shape == (B2, 1), out2.shape
    assert jnp.allclose(out2, ref2, atol=5e-4, rtol=5e-4)

    print("KERNEL_OK")
</pallas_src>

<mosaic_0001>
module attributes {stable_mosaic.version = 11 : i64} {
  func.func @lstm_kernel(%arg0: i32, %arg1: memref<3x128xf32, #tpu.memory_space<vmem>>, %arg2: memref<64x16xf32, #tpu.memory_space<vmem>>, %arg3: memref<64x2xf32, #tpu.memory_space<vmem>>, %arg4: memref<48x1xf32, #tpu.memory_space<vmem>>, %arg5: memref<1xf32, #tpu.memory_space<smem>>, %arg6: memref<1x128xf32, #tpu.memory_space<vmem>>) attributes {dimension_semantics = [#tpu.dimension_semantics<parallel>], iteration_bounds = array<i64: 1>, scalar_prefetch = 0 : i64, scratch_operands = 0 : i64, tpu.core_type = #tpu.core_type<tc>, window_params = [{transform_indices = @transform_0, window_bounds = array<i64: 3, 128>}, {pipeline_mode = #tpu.pipeline_mode<synchronous>, transform_indices = @transform_1, window_bounds = array<i64: 64, 16>}, {pipeline_mode = #tpu.pipeline_mode<synchronous>, transform_indices = @transform_2, window_bounds = array<i64: 64, 2>}, {pipeline_mode = #tpu.pipeline_mode<synchronous>, transform_indices = @transform_3, window_bounds = array<i64: 48, 1>}, {transform_indices = @transform_4, window_bounds = array<i64: 1>}, {transform_indices = @transform_5, window_bounds = array<i64: 1, 128>}]} {
    %c0 = arith.constant 0 : index
    %c0_0 = arith.constant 0 : index
    %0 = vector.load %arg2[%c0, %c0_0] : memref<64x16xf32, #tpu.memory_space<vmem>>, vector<64x16xf32>
    %c0_1 = arith.constant 0 : index
    %c0_2 = arith.constant 0 : index
    %1 = vector.load %arg3[%c0_1, %c0_2] : memref<64x2xf32, #tpu.memory_space<vmem>>, vector<64x1xf32>
    %2 = vector.shape_cast %1 : vector<64x1xf32> to vector<64x1xf32>
    %3 = vector.broadcast %2 : vector<64x1xf32> to vector<64x128xf32>
    %c0_3 = arith.constant 0 : index
    %c1 = arith.constant 1 : index
    %4 = vector.load %arg3[%c0_3, %c1] : memref<64x2xf32, #tpu.memory_space<vmem>>, vector<64x1xf32>
    %5 = vector.shape_cast %4 : vector<64x1xf32> to vector<64x1xf32>
    %6 = vector.broadcast %5 : vector<64x1xf32> to vector<64x128xf32>
    %c0_4 = arith.constant 0 : index
    %c0_5 = arith.constant 0 : index
    %7 = vector.load %arg4[%c0_4, %c0_5] : memref<48x1xf32, #tpu.memory_space<vmem>>, vector<16x1xf32>
    %8 = vector.shape_cast %7 : vector<16x1xf32> to vector<16x1xf32>
    %9 = vector.broadcast %8 : vector<16x1xf32> to vector<16x128xf32>
    %c16 = arith.constant 16 : index
    %c0_6 = arith.constant 0 : index
    %10 = vector.load %arg4[%c16, %c0_6] : memref<48x1xf32, #tpu.memory_space<vmem>>, vector<16x1xf32>
    %11 = vector.shape_cast %10 : vector<16x1xf32> to vector<16x1xf32>
    %12 = vector.broadcast %11 : vector<16x1xf32> to vector<16x128xf32>
    %c32 = arith.constant 32 : index
    %c0_7 = arith.constant 0 : index
    %13 = vector.load %arg4[%c32, %c0_7] : memref<48x1xf32, #tpu.memory_space<vmem>>, vector<16x1xf32>
    %14 = vector.shape_cast %13 : vector<16x1xf32> to vector<16x1xf32>
    %15 = vector.broadcast %14 : vector<16x1xf32> to vector<16x128xf32>
    %c0_8 = arith.constant 0 : index
    %c0_9 = arith.constant 0 : index
    %16 = vector.load %arg1[%c0_8, %c0_9] : memref<3x128xf32, #tpu.memory_space<vmem>>, vector<1x128xf32>
    %17 = vector.broadcast %16 : vector<1x128xf32> to vector<64x128xf32>
    %18 = arith.mulf %3, %17 : vector<64x128xf32>
    %19 = arith.addf %18, %6 : vector<64x128xf32>
    %20 = vector.extract_strided_slice %19 {offsets = [0, 0], sizes = [16, 128], strides = [1, 1]} : vector<64x128xf32> to vector<16x128xf32>
    %cst = arith.constant 5.000000e-01 : f32
    %21 = vector.broadcast %cst : f32 to vector<16x128xf32>
    %22 = arith.mulf %21, %20 : vector<16x128xf32>
    %23 = math.tanh %22 : vector<16x128xf32>
    %cst_10 = arith.constant 5.000000e-01 : f32
    %24 = vector.broadcast %cst_10 : f32 to vector<16x128xf32>
    %25 = arith.mulf %24, %23 : vector<16x128xf32>
    %cst_11 = arith.constant 5.000000e-01 : f32
    %26 = vector.broadcast %cst_11 : f32 to vector<16x128xf32>
    %27 = arith.addf %25, %26 : vector<16x128xf32>
    %28 = vector.extract_strided_slice %19 {offsets = [32, 0], sizes = [16, 128], strides = [1, 1]} : vector<64x128xf32> to vector<16x128xf32>
    %29 = math.tanh %28 : vector<16x128xf32>
    %30 = vector.extract_strided_slice %19 {offsets = [48, 0], sizes = [16, 128], strides = [1, 1]} : vector<64x128xf32> to vector<16x128xf32>
    %cst_12 = arith.constant 5.000000e-01 : f32
    %31 = vector.broadcast %cst_12 : f32 to vector<16x128xf32>
    %32 = arith.mulf %31, %30 : vector<16x128xf32>
    %33 = math.tanh %32 : vector<16x128xf32>
    %cst_13 = arith.constant 5.000000e-01 : f32
    %34 = vector.broadcast %cst_13 : f32 to vector<16x128xf32>
    %35 = arith.mulf %34, %33 : vector<16x128xf32>
    %cst_14 = arith.constant 5.000000e-01 : f32
    %36 = vector.broadcast %cst_14 : f32 to vector<16x128xf32>
    %37 = arith.addf %35, %36 : vector<16x128xf32>
    %38 = arith.mulf %27, %29 : vector<16x128xf32>
    %39 = math.tanh %38 : vector<16x128xf32>
    %40 = arith.mulf %37, %39 : vector<16x128xf32>
    %41 = arith.mulf %40, %9 : vector<16x128xf32>
    %c1_15 = arith.constant 1 : index
    %c0_16 = arith.constant 0 : index
    %42 = vector.load %arg1[%c1_15, %c0_16] : memref<3x128xf32, #tpu.memory_space<vmem>>, vector<1x128xf32>
    %43 = vector.broadcast %42 : vector<1x128xf32> to vector<64x128xf32>
    %44 = arith.mulf %3, %43 : vector<64x128xf32>
    %45 = arith.addf %44, %6 : vector<64x128xf32>
    %cst_17 = arith.constant dense<0.000000e+00> : vector<64x128xf32>
    %46 = tpu.matmul %0, %40, %cst_17 {dimension_numbers = #tpu.dot_dimension_numbers<[1], [0], [0], [1], [0, 0, 1, 1], [], []>} : vector<64x16xf32>, vector<16x128xf32>, vector<64x128xf32> -> vector<64x128xf32>
    %47 = arith.addf %46, %45 : vector<64x128xf32>
    %48 = vector.extract_strided_slice %47 {offsets = [0, 0], sizes = [16, 128], strides = [1, 1]} : vector<64x128xf32> to vector<16x128xf32>
    %cst_18 = arith.constant 5.000000e-01 : f32
    %49 = vector.broadcast %cst_18 : f32 to vector<16x128xf32>
    %50 = arith.mulf %49, %48 : vector<16x128xf32>
    %51 = math.tanh %50 : vector<16x128xf32>
    %cst_19 = arith.constant 5.000000e-01 : f32
    %52 = vector.broadcast %cst_19 : f32 to vector<16x128xf32>
    %53 = arith.mulf %52, %51 : vector<16x128xf32>
    %cst_20 = arith.constant 5.000000e-01 : f32
    %54 = vector.broadcast %cst_20 : f32 to vector<16x128xf32>
    %55 = arith.addf %53, %54 : vector<16x128xf32>
    %56 = vector.extract_strided_slice %47 {offsets = [16, 0], sizes = [16, 128], strides = [1, 1]} : vector<64x128xf32> to vector<16x128xf32>
    %cst_21 = arith.constant 5.000000e-01 : f32
    %57 = vector.broadcast %cst_21 : f32 to vector<16x128xf32>
    %58 = arith.mulf %57, %56 : vector<16x128xf32>
    %59 = math.tanh %58 : vector<16x128xf32>
    %cst_22 = arith.constant 5.000000e-01 : f32
    %60 = vector.broadcast %cst_22 : f32 to vector<16x128xf32>
    %61 = arith.mulf %60, %59 : vector<16x128xf32>
    %cst_23 = arith.constant 5.000000e-01 : f32
    %62 = vector.broadcast %cst_23 : f32 to vector<16x128xf32>
    %63 = arith.addf %61, %62 : vector<16x128xf32>
    %64 = vector.extract_strided_slice %47 {offsets = [32, 0], sizes = [16, 128], strides = [1, 1]} : vector<64x128xf32> to vector<16x128xf32>
    %65 = math.tanh %64 : vector<16x128xf32>
    %66 = vector.extract_strided_slice %47 {offsets = [48, 0], sizes = [16, 128], strides = [1, 1]} : vector<64x128xf32> to vector<16x128xf32>
    %cst_24 = arith.constant 5.000000e-01 : f32
    %67 = vector.broadcast %cst_24 : f32 to vector<16x128xf32>
    %68 = arith.mulf %67, %66 : vector<16x128xf32>
    %69 = math.tanh %68 : vector<16x128xf32>
    %cst_25 = arith.constant 5.000000e-01 : f32
    %70 = vector.broadcast %cst_25 : f32 to vector<16x128xf32>
    %71 = arith.mulf %70, %69 : vector<16x128xf32>
    %cst_26 = arith.constant 5.000000e-01 : f32
    %72 = vector.broadcast %cst_26 : f32 to vector<16x128xf32>
    %73 = arith.addf %71, %72 : vector<16x128xf32>
    %74 = arith.mulf %63, %38 : vector<16x128xf32>
    %75 = arith.mulf %55, %65 : vector<16x128xf32>
    %76 = arith.addf %74, %75 : vector<16x128xf32>
    %77 = math.tanh %76 : vector<16x128xf32>
    %78 = arith.mulf %73, %77 : vector<16x128xf32>
    %79 = arith.mulf %78, %12 : vector<16x128xf32>
    %80 = arith.addf %41, %79 : vector<16x128xf32>
    %c2 = arith.constant 2 : index
    %c0_27 = arith.constant 0 : index
    %81 = vector.load %arg1[%c2, %c0_27] : memref<3x128xf32, #tpu.memory_space<vmem>>, vector<1x128xf32>
    %82 = vector.broadcast %81 : vector<1x128xf32> to vector<64x128xf32>
    %83 = arith.mulf %3, %82 : vector<64x128xf32>
    %84 = arith.addf %83, %6 : vector<64x128xf32>
    %cst_28 = arith.constant dense<0.000000e+00> : vector<64x128xf32>
    %85 = tpu.matmul %0, %78, %cst_28 {dimension_numbers = #tpu.dot_dimension_numbers<[1], [0], [0], [1], [0, 0, 1, 1], [], []>} : vector<64x16xf32>, vector<16x128xf32>, vector<64x128xf32> -> vector<64x128xf32>
    %86 = arith.addf %85, %84 : vector<64x128xf32>
    %87 = vector.extract_strided_slice %86 {offsets = [0, 0], sizes = [16, 128], strides = [1, 1]} : vector<64x128xf32> to vector<16x128xf32>
    %cst_29 = arith.constant 5.000000e-01 : f32
    %88 = vector.broadcast %cst_29 : f32 to vector<16x128xf32>
    %89 = arith.mulf %88, %87 : vector<16x128xf32>
    %90 = math.tanh %89 : vector<16x128xf32>
    %cst_30 = arith.constant 5.000000e-01 : f32
    %91 = vector.broadcast %cst_30 : f32 to vector<16x128xf32>
    %92 = arith.mulf %91, %90 : vector<16x128xf32>
    %cst_31 = arith.constant 5.000000e-01 : f32
    %93 = vector.broadcast %cst_31 : f32 to vector<16x128xf32>
    %94 = arith.addf %92, %93 : vector<16x128xf32>
    %95 = vector.extract_strided_slice %86 {offsets = [16, 0], sizes = [16, 128], strides = [1, 1]} : vector<64x128xf32> to vector<16x128xf32>
    %cst_32 = arith.constant 5.000000e-01 : f32
    %96 = vector.broadcast %cst_32 : f32 to vector<16x128xf32>
    %97 = arith.mulf %96, %95 : vector<16x128xf32>
    %98 = math.tanh %97 : vector<16x128xf32>
    %cst_33 = arith.constant 5.000000e-01 : f32
    %99 = vector.broadcast %cst_33 : f32 to vector<16x128xf32>
    %100 = arith.mulf %99, %98 : vector<16x128xf32>
    %cst_34 = arith.constant 5.000000e-01 : f32
    %101 = vector.broadcast %cst_34 : f32 to vector<16x128xf32>
    %102 = arith.addf %100, %101 : vector<16x128xf32>
    %103 = vector.extract_strided_slice %86 {offsets = [32, 0], sizes = [16, 128], strides = [1, 1]} : vector<64x128xf32> to vector<16x128xf32>
    %104 = math.tanh %103 : vector<16x128xf32>
    %105 = vector.extract_strided_slice %86 {offsets = [48, 0], sizes = [16, 128], strides = [1, 1]} : vector<64x128xf32> to vector<16x128xf32>
    %cst_35 = arith.constant 5.000000e-01 : f32
    %106 = vector.broadcast %cst_35 : f32 to vector<16x128xf32>
    %107 = arith.mulf %106, %105 : vector<16x128xf32>
    %108 = math.tanh %107 : vector<16x128xf32>
    %cst_36 = arith.constant 5.000000e-01 : f32
    %109 = vector.broadcast %cst_36 : f32 to vector<16x128xf32>
    %110 = arith.mulf %109, %108 : vector<16x128xf32>
    %cst_37 = arith.constant 5.000000e-01 : f32
    %111 = vector.broadcast %cst_37 : f32 to vector<16x128xf32>
    %112 = arith.addf %110, %111 : vector<16x128xf32>
    %113 = arith.mulf %102, %76 : vector<16x128xf32>
    %114 = arith.mulf %94, %104 : vector<16x128xf32>
    %115 = arith.addf %113, %114 : vector<16x128xf32>
    %116 = math.tanh %115 : vector<16x128xf32>
    %117 = arith.mulf %112, %116 : vector<16x128xf32>
    %118 = arith.mulf %117, %15 : vector<16x128xf32>
    %119 = arith.addf %80, %118 : vector<16x128xf32>
    %cst_38 = arith.constant dense<0.000000e+00> : vector<128xf32>
    %120 = vector.multi_reduction <add>, %119, %cst_38 [0] : vector<16x128xf32> to vector<128xf32>
    %121 = vector.shape_cast %120 : vector<128xf32> to vector<1x128xf32>
    %c0_39 = arith.constant 0 : index
    %122 = memref.load %arg5[%c0_39] : memref<1xf32, #tpu.memory_space<smem>>
    %123 = vector.broadcast %122 : f32 to vector<1x128xf32>
    %124 = arith.addf %121, %123 : vector<1x128xf32>
    %c0_40 = arith.constant 0 : index
    %c0_41 = arith.constant 0 : index
    %125 = vector.load %arg6[%c0_40, %c0_41] : memref<1x128xf32, #tpu.memory_space<vmem>>, vector<1x128xf32>
    tpu.vector_store %arg6[%c0_40, %c0_41], %124 {strides = array<i32>} : memref<1x128xf32, #tpu.memory_space<vmem>>, vector<1x128xf32>,
    return
  }
  func.func @transform_0(%arg0: i32) -> (i32, i32) {
    %c0_i32 = arith.constant 0 : i32
    %c0_i32_0 = arith.constant 0 : i32
    return %c0_i32, %arg0 : i32, i32
  }
  func.func @transform_1(%arg0: i32) -> (i32, i32) {
    %c0_i32 = arith.constant 0 : i32
    %c0_i32_0 = arith.constant 0 : i32
    %c0_i32_1 = arith.constant 0 : i32
    return %c0_i32, %c0_i32_0 : i32, i32
  }
  func.func @transform_2(%arg0: i32) -> (i32, i32) {
    %c0_i32 = arith.constant 0 : i32
    %c0_i32_0 = arith.constant 0 : i32
    %c0_i32_1 = arith.constant 0 : i32
    return %c0_i32, %c0_i32_0 : i32, i32
  }
  func.func @transform_3(%arg0: i32) -> (i32, i32) {
    %c0_i32 = arith.constant 0 : i32
    %c0_i32_0 = arith.constant 0 : i32
    %c0_i32_1 = arith.constant 0 : i32
    return %c0_i32, %c0_i32_0 : i32, i32
  }
  func.func @transform_4(%arg0: i32) -> i32 {
    %c0_i32 = arith.constant 0 : i32
    %c0_i32_0 = arith.constant 0 : i32
    return %c0_i32 : i32
  }
  func.func @transform_5(%arg0: i32) -> (i32, i32) {
    %c0_i32 = arith.constant 0 : i32
    %c0_i32_0 = arith.constant 0 : i32
    return %c0_i32, %arg0 : i32, i32
  }
}

</mosaic_0001>

<llo_original>
// kernel: tpu_custom_call.1
$region0: #{tpu_custom_call.1}
  #allocation0 [shape = 'u32[]', space=smem, size = 0x4, offset = 0x4, fixed_abs, tag = 'smem constant byte address 0x4 - core index']
  #allocation1 [shape = 'u32[144,128]{1,0:T(1,128)}', space=vmem, size = 0x12000, scoped, tag = 'internal scratch']
  #allocation2 [shape = 'f32[1]{0:T(128)S(6)}', space=smem, size = 0x200, scoped, tag = 'scoped memory for tpu_custom_call.1']
  %s0 = inlined_call_operand.vmem [shape: f32[3,128], index: 0, kind: input, shape index: {}]
  %s1 = inlined_call_operand.vmem [shape: f32[64,16], index: 1, kind: input, shape index: {}]
  %s2 = inlined_call_operand.vmem [shape: f32[64,2], index: 2, kind: input, shape index: {}]
  %s3 = inlined_call_operand.vmem [shape: f32[48,1], index: 3, kind: input, shape index: {}]
  %s4 = inlined_call_operand.<no memory space> [shape: f32[1], index: 4, kind: input, shape index: {}]
  %s5 = inlined_call_operand.hbm [shape: f32[1,128], index: 5, kind: output, shape index: {}]
  %s6 = sld [smem:[#allocation0]]
  $region30: #{tpu_custom_call.1} parent=0
    _
  %s8 = ssub.s32 1, %s6
  %s9 = scalar_select 0, %s8, %s6
  %10 = sst [smem:[#allocation2]] %s4
  $region1: #{tpu_custom_call.1} parent=0
    #allocation3 [shape = 'u8[512]{0}', space=vmem, size = 0x400, scoped, tag = 'output window, operand 0, single buffered']
    #allocation4 [shape = 's32[1]{0}', space=sflag, size = 0x4, scoped, tag = 'scoped memory for tpu_custom_call.1']
    %11 = vsyncpa [#allocation4], 0
    // Predicated region
    $region2: #{tpu_custom_call.1} parent=1 // pred_check
      _
    $region3: #{tpu_custom_call.1} parent=1 // pred_check_branch
      %13 = sbr.rel (0) target = $region5
    $region4: #{tpu_custom_call.1} parent=1 // pred_region
      _
    $region5: #{tpu_custom_call.1} parent=1 // pred_fallthru
      _
    // Predicated region
    $region6: #{tpu_custom_call.1} parent=1 // pred_check
      _
    $region7: #{tpu_custom_call.1} parent=1 // pred_check_branch
      %15 = sbr.rel (0) target = $region9
    $region8: #{tpu_custom_call.1} parent=1 // pred_region
      _
    $region9: #{tpu_custom_call.1} parent=1 // pred_fallthru
      _
    // Predicated region
    $region10: #{tpu_custom_call.1} parent=1 // pred_check
      _
    $region11: #{tpu_custom_call.1} parent=1 // pred_check_branch
      %17 = sbr.rel (0) target = $region13
    $region12: #{tpu_custom_call.1} parent=1 // pred_region
      _
    $region13: #{tpu_custom_call.1} parent=1 // pred_fallthru
      _
    // Predicated region
    $region14: #{tpu_custom_call.1} parent=1 // pred_check
      _
    $region15: #{tpu_custom_call.1} parent=1 // pred_check_branch
      %19 = sbr.rel (0) target = $region17
    $region16: #{tpu_custom_call.1} parent=1 // pred_region
      _
    $region17: #{tpu_custom_call.1} parent=1 // pred_fallthru
      _
    // Predicated region
    $region18: #{tpu_custom_call.1} parent=1 // pred_check
      _
    $region19: #{tpu_custom_call.1} parent=1 // pred_check_branch
      %21 = sbr.rel (0) target = $region21
    $region20: #{tpu_custom_call.1} parent=1 // pred_region
      _
    $region21: #{tpu_custom_call.1} parent=1 // pred_fallthru
      _
    %v22 = vld [vmem:[%s1] sm:$0xff]
    %v23 = vld [vmem:[%s1 + $0x8] sm:$0xff]
    %v24 = vld [vmem:[%s1 + $0x10] sm:$0xff]
    %v25 = vld [vmem:[%s1 + $0x18] sm:$0xff]
    %v26 = vld [vmem:[%s1 + $0x20] sm:$0xff]
    %v27 = vld [vmem:[%s1 + $0x28] sm:$0xff]
    %v28 = vld [vmem:[%s1 + $0x30] sm:$0xff]
    %v29 = vld [vmem:[%s1 + $0x38] sm:$0xff]
    %v30 = vld [vmem:[%s2] sm:$0xff]
    %v31 = vld [vmem:[%s2 + $0x8] sm:$0xff]
    %v32 = vld [vmem:[%s2 + $0x10] sm:$0xff]
    %v33 = vld [vmem:[%s2 + $0x18] sm:$0xff]
    %v34 = vld [vmem:[%s2 + $0x20] sm:$0xff]
    %v35 = vld [vmem:[%s2 + $0x28] sm:$0xff]
    %v36 = vld [vmem:[%s2 + $0x30] sm:$0xff]
    %v37 = vld [vmem:[%s2 + $0x38] sm:$0xff]
    %39 = vset.pattern.permute.xlu0 0
    %40 = vperm.xlu0 %39, %v30
    %v41 = vpop.permute.xlu0 %40
    %44 = vset.pattern.permute.xlu0 0
    %45 = vperm.xlu0 %44, %v31
    %v46 = vpop.permute.xlu0 %45
    %49 = vset.pattern.permute.xlu0 0
    %50 = vperm.xlu0 %49, %v32
    %v51 = vpop.permute.xlu0 %50
    %54 = vset.pattern.permute.xlu0 0
    %55 = vperm.xlu0 %54, %v33
    %v56 = vpop.permute.xlu0 %55
    %59 = vset.pattern.permute.xlu0 0
    %60 = vperm.xlu0 %59, %v34
    %v61 = vpop.permute.xlu0 %60
    %64 = vset.pattern.permute.xlu0 0
    %65 = vperm.xlu0 %64, %v35
    %v66 = vpop.permute.xlu0 %65
    %69 = vset.pattern.permute.xlu0 0
    %70 = vperm.xlu0 %69, %v36
    %v71 = vpop.permute.xlu0 %70
    %74 = vset.pattern.permute.xlu0 0
    %75 = vperm.xlu0 %74, %v37
    %v76 = vpop.permute.xlu0 %75
    %78 = vset.pattern.permute.xlu0 1
    %79 = vperm.xlu0 %78, %v30
    %v80 = vpop.permute.xlu0 %79
    %82 = vset.pattern.permute.xlu0 1
    %83 = vperm.xlu0 %82, %v31
    %v84 = vpop.permute.xlu0 %83
    %86 = vset.pattern.permute.xlu0 1
    %87 = vperm.xlu0 %86, %v32
    %v88 = vpop.permute.xlu0 %87
    %90 = vset.pattern.permute.xlu0 1
    %91 = vperm.xlu0 %90, %v33
    %v92 = vpop.permute.xlu0 %91
    %94 = vset.pattern.permute.xlu0 1
    %95 = vperm.xlu0 %94, %v34
    %v96 = vpop.permute.xlu0 %95
    %98 = vset.pattern.permute.xlu0 1
    %99 = vperm.xlu0 %98, %v35
    %v100 = vpop.permute.xlu0 %99
    %102 = vset.pattern.permute.xlu0 1
    %103 = vperm.xlu0 %102, %v36
    %v104 = vpop.permute.xlu0 %103
    %106 = vset.pattern.permute.xlu0 1
    %107 = vperm.xlu0 %106, %v37
    %v108 = vpop.permute.xlu0 %107
    %v110 = vld [vmem:[%s3] sm:$0xff]
    %v111 = vld [vmem:[%s3 + $0x8] sm:$0xff]
    %113 = vset.pattern.permute.xlu0 0
    %114 = vperm.xlu0 %113, %v110
    %v115 = vpop.permute.xlu0 %114
    %118 = vset.pattern.permute.xlu0 0
    %119 = vperm.xlu0 %118, %v111
    %v120 = vpop.permute.xlu0 %119
    %v122 = vld [vmem:[%s3 + $0x10] sm:$0xff]
    %v123 = vld [vmem:[%s3 + $0x18] sm:$0xff]
    %125 = vset.pattern.permute.xlu0 0
    %126 = vperm.xlu0 %125, %v122
    %v127 = vpop.permute.xlu0 %126
    %130 = vset.pattern.permute.xlu0 0
    %131 = vperm.xlu0 %130, %v123
    %v132 = vpop.permute.xlu0 %131
    %v134 = vld [vmem:[%s3 + $0x20] sm:$0xff]
    %v135 = vld [vmem:[%s3 + $0x28] sm:$0xff]
    %137 = vset.pattern.permute.xlu0 0
    %138 = vperm.xlu0 %137, %v134
    %v139 = vpop.permute.xlu0 %138
    %142 = vset.pattern.permute.xlu0 0
    %143 = vperm.xlu0 %142, %v135
    %v144 = vpop.permute.xlu0 %143
    %v146 = vld [vmem:[%s0] sm:$0x1]
    %v147 = vlaneseq
    %v148 = vshrl.u32 %v147, 7
    %v149 = vsub.s32 0, %v148
    %v150 = vrot.slane %v146, %v149
    %v151 = vmul.f32 %v41, %v150
    %v152 = vmul.f32 %v46, %v150
    %v153 = vmul.f32 %v61, %v150
    %v154 = vmul.f32 %v66, %v150
    %v155 = vmul.f32 %v71, %v150
    %v156 = vmul.f32 %v76, %v150
    %v157 = vadd.f32 %v151, %v80
    %v158 = vadd.f32 %v152, %v84
    %v159 = vadd.f32 %v153, %v96
    %v160 = vadd.f32 %v154, %v100
    %v161 = vadd.f32 %v155, %v104
    %v162 = vadd.f32 %v156, %v108
    %v163 = vmul.f32 %v157, 0.5
    %v164 = vmul.f32 %v158, 0.5
    %v165 = vtanh.pop %v163
    %v166 = vtanh.pop %v164
    %v167 = vmul.f32 %v165, 0.5
    %v168 = vmul.f32 %v166, 0.5
    %v169 = vadd.f32 %v167, 0.5
    %v170 = vadd.f32 %v168, 0.5
    %v171 = vtanh.pop %v159
    %v172 = vtanh.pop %v160
    %v173 = vmul.f32 %v161, 0.5
    %v174 = vmul.f32 %v162, 0.5
    %v175 = vtanh.pop %v173
    %v176 = vtanh.pop %v174
    %v177 = vmul.f32 %v175, 0.5
    %v178 = vmul.f32 %v176, 0.5
    %v179 = vadd.f32 %v177, 0.5
    %v180 = vadd.f32 %v178, 0.5
    %v181 = vmul.f32 %v169, %v171
    %v182 = vmul.f32 %v170, %v172
    %v183 = vtanh.pop %v181
    %v184 = vtanh.pop %v182
    %v185 = vmul.f32 %v179, %v183
    %v186 = vmul.f32 %v180, %v184
    %v187 = vmul.f32 %v185, %v115
    %v188 = vmul.f32 %v186, %v120
    %v189 = vld [vmem:[%s0 + $0x1] sm:$0x1]
    %v190 = vlaneseq
    %v191 = vshrl.u32 %v190, 7
    %v192 = vsub.s32 0, %v191
    %v193 = vrot.slane %v189, %v192
    %v194 = vmul.f32 %v41, %v193
    %v195 = vmul.f32 %v46, %v193
    %v196 = vmul.f32 %v51, %v193
    %v197 = vmul.f32 %v56, %v193
    %v198 = vmul.f32 %v61, %v193
    %v199 = vmul.f32 %v66, %v193
    %v200 = vmul.f32 %v71, %v193
    %v201 = vmul.f32 %v76, %v193
    %v202 = vadd.f32 %v194, %v80
    %v203 = vadd.f32 %v195, %v84
    %v204 = vadd.f32 %v196, %v88
    %v205 = vadd.f32 %v197, %v92
    %v206 = vadd.f32 %v198, %v96
    %v207 = vadd.f32 %v199, %v100
    %v208 = vadd.f32 %v200, %v104
    %v209 = vadd.f32 %v201, %v108
    %vm210 = vcmask 130048
    %v212 = vsel %vm210, %v22, 0
    %v215 = vsel %vm210, %v23, 0
    %v218 = vsel %vm210, %v24, 0
    %v221 = vsel %vm210, %v25, 0
    %v224 = vsel %vm210, %v26, 0
    %v227 = vsel %vm210, %v27, 0
    %v230 = vsel %vm210, %v28, 0
    %v233 = vsel %vm210, %v29, 0
    %235 = vmatprep.subr.mxu0 0.0
    %236 = vmatpush1.msra.mxu0 %v185
    %237 = vmatprep.subr.mxu0 0.0
    %238 = vmatpush1.msra.mxu0 %v186
    %239 = vmatprep.subr.mxu0 0.0
    %240 = vmatpush1.msra.mxu0 0.0
    %241 = vmatprep.subr.mxu0 0.0
    %242 = vmatpush1.msra.mxu0 0.0
    %243 = vmatprep.subr.mxu0 0.0
    %244 = vmatpush1.msra.mxu0 0.0
    %245 = vmatprep.subr.mxu0 0.0
    %246 = vmatpush1.msra.mxu0 0.0
    %247 = vmatprep.subr.mxu0 0.0
    %248 = vmatpush1.msra.mxu0 0.0
    %249 = vmatprep.subr.mxu0 0.0
    %250 = vmatpush1.msra.mxu0 0.0
    %251 = vmatprep.subr.mxu0 0.0
    %252 = vmatpush1.msra.mxu0 0.0
    %253 = vmatprep.subr.mxu0 0.0
    %254 = vmatpush1.msra.mxu0 0.0
    %255 = vmatprep.subr.mxu0 0.0
    %256 = vmatpush1.msra.mxu0 0.0
    %257 = vmatprep.subr.mxu0 0.0
    %258 = vmatpush1.msra.mxu0 0.0
    %259 = vmatprep.subr.mxu0 0.0
    %260 = vmatpush1.msra.mxu0 0.0
    %261 = vmatprep.subr.mxu0 0.0
    %262 = vmatpush1.msra.mxu0 0.0
    %263 = vmatprep.subr.mxu0 0.0
    %264 = vmatpush1.msra.mxu0 0.0
    %265 = vmatprep.subr.mxu0 0.0
    %266 = vmatpush1.msra.mxu0 0.0
    %267 = vmatprep.subr.mxu0 0.0
    %268 = vmatpush1.msra.mxu0 0.0
    %269 = vmatprep.subr.mxu0 0.0
    %270 = vmatpush1.msra.mxu0 0.0
    %271 = vmatprep.subr.mxu0 0.0
    %272 = vmatpush1.msra.mxu0 0.0
    %273 = vmatprep.subr.mxu0 0.0
    %274 = vmatpush1.msra.mxu0 0.0
    %275 = vmatprep.subr.mxu0 0.0
    %276 = vmatpush1.msra.mxu0 0.0
    %277 = vmatprep.subr.mxu0 0.0
    %278 = vmatpush1.msra.mxu0 0.0
    %279 = vmatprep.subr.mxu0 0.0
    %280 = vmatpush1.msra.mxu0 0.0
    %281 = vmatprep.subr.mxu0 0.0
    %282 = vmatpush1.msra.mxu0 0.0
    %283 = vmatprep.subr.mxu0 0.0
    %284 = vmatpush1.msra.mxu0 0.0
    %285 = vmatprep.subr.mxu0 0.0
    %286 = vmatpush1.msra.mxu0 0.0
    %287 = vmatprep.subr.mxu0 0.0
    %288 = vmatpush1.msra.mxu0 0.0
    %289 = vmatprep.subr.mxu0 0.0
    %290 = vmatpush1.msra.mxu0 0.0
    %291 = vmatprep.subr.mxu0 0.0
    %292 = vmatpush1.msra.mxu0 0.0
    %293 = vmatprep.subr.mxu0 0.0
    %294 = vmatpush1.msra.mxu0 0.0
    %295 = vmatprep.subr.mxu0 0.0
    %296 = vmatpush1.msra.mxu0 0.0
    %297 = vmatprep.subr.mxu0 0.0
    %298 = vmatpush1.msra.mxu0 0.0
    %299 = vmatprep.mubr.f32.mxu0 0.0
    %300 = vmatmul.mubr.f32.gmra.mrb[0].mxu0 %v212
    %v301 = vpop.f32.mrb[0].mxu0
    %v302 = vadd.f32 %v202, %v301
    %v303 = vpop.f32.mrb[0].mxu0
    %304 = vmatprep.mubr.f32.mxu0 0.0
    %305 = vmatmul.mubr.f32.gmra.mrb[0].mxu0 %v215
    %v306 = vpop.f32.mrb[0].mxu0
    %v307 = vadd.f32 %v203, %v306
    %v308 = vpop.f32.mrb[0].mxu0
    %309 = vmatprep.mubr.f32.mxu0 0.0
    %310 = vmatmul.mubr.f32.gmra.mrb[0].mxu0 %v218
    %v311 = vpop.f32.mrb[0].mxu0
    %v312 = vadd.f32 %v204, %v311
    %v313 = vpop.f32.mrb[0].mxu0
    %314 = vmatprep.mubr.f32.mxu0 0.0
    %315 = vmatmul.mubr.f32.gmra.mrb[0].mxu0 %v221
    %v316 = vpop.f32.mrb[0].mxu0
    %v317 = vadd.f32 %v205, %v316
    %v318 = vpop.f32.mrb[0].mxu0
    %319 = vmatprep.mubr.f32.mxu0 0.0
    %320 = vmatmul.mubr.f32.gmra.mrb[0].mxu0 %v224
    %v321 = vpop.f32.mrb[0].mxu0
    %v322 = vadd.f32 %v206, %v321
    %v323 = vpop.f32.mrb[0].mxu0
    %324 = vmatprep.mubr.f32.mxu0 0.0
    %325 = vmatmul.mubr.f32.gmra.mrb[0].mxu0 %v227
    %v326 = vpop.f32.mrb[0].mxu0
    %v327 = vadd.f32 %v207, %v326
    %v328 = vpop.f32.mrb[0].mxu0
    %329 = vmatprep.mubr.f32.mxu0 0.0
    %330 = vmatmul.mubr.f32.gmra.mrb[0].mxu0 %v230
    %v331 = vpop.f32.mrb[0].mxu0
    %v332 = vadd.f32 %v208, %v331
    %v333 = vpop.f32.mrb[0].mxu0
    %334 = vmatprep.mubr.f32.mxu0 0.0
    %335 = vmatmul.mubr.f32.gmra.mrb[0].mxu0 %v233
    %v336 = vpop.f32.mrb[0].mxu0
    %v337 = vadd.f32 %v209, %v336
    %v338 = vpop.f32.mrb[0].mxu0
    %339 = vdwg.mxu0
    %v340 = vmul.f32 %v302, 0.5
    %v341 = vmul.f32 %v307, 0.5
    %v342 = vtanh.pop %v340
    %v343 = vtanh.pop %v341
    %v344 = vmul.f32 %v342, 0.5
    %v345 = vmul.f32 %v343, 0.5
    %v346 = vadd.f32 %v344, 0.5
    %v347 = vadd.f32 %v345, 0.5
    %v348 = vmul.f32 %v312, 0.5
    %v349 = vmul.f32 %v317, 0.5
    %v350 = vtanh.pop %v348
    %v351 = vtanh.pop %v349
    %v352 = vmul.f32 %v350, 0.5
    %v353 = vmul.f32 %v351, 0.5
    %v354 = vadd.f32 %v352, 0.5
    %v355 = vadd.f32 %v353, 0.5
    %v356 = vtanh.pop %v322
    %v357 = vtanh.pop %v327
    %v358 = vmul.f32 %v332, 0.5
    %v359 = vmul.f32 %v337, 0.5
    %v360 = vtanh.pop %v358
    %v361 = vtanh.pop %v359
    %v362 = vmul.f32 %v360, 0.5
    %v363 = vmul.f32 %v361, 0.5
    %v364 = vadd.f32 %v362, 0.5
    %v365 = vadd.f32 %v363, 0.5
    %v366 = vmul.f32 %v354, %v181
    %v367 = vmul.f32 %v355, %v182
    %v368 = vmul.f32 %v346, %v356
    %v369 = vmul.f32 %v347, %v357
    %v370 = vadd.f32 %v366, %v368
    %v371 = vadd.f32 %v367, %v369
    %v372 = vtanh.pop %v370
    %v373 = vtanh.pop %v371
    %v374 = vmul.f32 %v364, %v372
    %v375 = vmul.f32 %v365, %v373
    %v376 = vmul.f32 %v374, %v127
    %v377 = vmul.f32 %v375, %v132
    %v378 = vadd.f32 %v187, %v376
    %v379 = vadd.f32 %v188, %v377
    %v380 = vld [vmem:[%s0 + $0x2] sm:$0x1]
    %v381 = vlaneseq
    %v382 = vshrl.u32 %v381, 7
    %v383 = vsub.s32 0, %v382
    %v384 = vrot.slane %v380, %v383
    %v385 = vmul.f32 %v41, %v384
    %v386 = vmul.f32 %v46, %v384
    %v387 = vmul.f32 %v51, %v384
    %v388 = vmul.f32 %v56, %v384
    %v389 = vmul.f32 %v61, %v384
    %v390 = vmul.f32 %v66, %v384
    %v391 = vmul.f32 %v71, %v384
    %v392 = vmul.f32 %v76, %v384
    %v393 = vadd.f32 %v385, %v80
    %v394 = vadd.f32 %v386, %v84
    %v395 = vadd.f32 %v387, %v88
    %v396 = vadd.f32 %v388, %v92
    %v397 = vadd.f32 %v389, %v96
    %v398 = vadd.f32 %v390, %v100
    %v399 = vadd.f32 %v391, %v104
    %v400 = vadd.f32 %v392, %v108
    %401 = vmatprep.subr.mxu0 0.0
    %402 = vmatpush1.msra.mxu0 %v374
    %403 = vmatprep.subr.mxu0 0.0
    %404 = vmatpush1.msra.mxu0 %v375
    %405 = vmatprep.subr.mxu0 0.0
    %406 = vmatpush1.msra.mxu0 0.0
    %407 = vmatprep.subr.mxu0 0.0
    %408 = vmatpush1.msra.mxu0 0.0
    %409 = vmatprep.subr.mxu0 0.0
    %410 = vmatpush1.msra.mxu0 0.0
    %411 = vmatprep.subr.mxu0 0.0
    %412 = vmatpush1.msra.mxu0 0.0
    %413 = vmatprep.subr.mxu0 0.0
    %414 = vmatpush1.msra.mxu0 0.0
    %415 = vmatprep.subr.mxu0 0.0
    %416 = vmatpush1.msra.mxu0 0.0
    %417 = vmatprep.subr.mxu0 0.0
    %418 = vmatpush1.msra.mxu0 0.0
    %419 = vmatprep.subr.mxu0 0.0
    %420 = vmatpush1.msra.mxu0 0.0
    %421 = vmatprep.subr.mxu0 0.0
    %422 = vmatpush1.msra.mxu0 0.0
    %423 = vmatprep.subr.mxu0 0.0
    %424 = vmatpush1.msra.mxu0 0.0
    %425 = vmatprep.subr.mxu0 0.0
    %426 = vmatpush1.msra.mxu0 0.0
    %427 = vmatprep.subr.mxu0 0.0
    %428 = vmatpush1.msra.mxu0 0.0
    %429 = vmatprep.subr.mxu0 0.0
    %430 = vmatpush1.msra.mxu0 0.0
    %431 = vmatprep.subr.mxu0 0.0
    %432 = vmatpush1.msra.mxu0 0.0
    %433 = vmatprep.subr.mxu0 0.0
    %434 = vmatpush1.msra.mxu0 0.0
    %435 = vmatprep.subr.mxu0 0.0
    %436 = vmatpush1.msra.mxu0 0.0
    %437 = vmatprep.subr.mxu0 0.0
    %438 = vmatpush1.msra.mxu0 0.0
    %439 = vmatprep.subr.mxu0 0.0
    %440 = vmatpush1.msra.mxu0 0.0
    %441 = vmatprep.subr.mxu0 0.0
    %442 = vmatpush1.msra.mxu0 0.0
    %443 = vmatprep.subr.mxu0 0.0
    %444 = vmatpush1.msra.mxu0 0.0
    %445 = vmatprep.subr.mxu0 0.0
    %446 = vmatpush1.msra.mxu0 0.0
    %447 = vmatprep.subr.mxu0 0.0
    %448 = vmatpush1.msra.mxu0 0.0
    %449 = vmatprep.subr.mxu0 0.0
    %450 = vmatpush1.msra.mxu0 0.0
    %451 = vmatprep.subr.mxu0 0.0
    %452 = vmatpush1.msra.mxu0 0.0
    %453 = vmatprep.subr.mxu0 0.0
    %454 = vmatpush1.msra.mxu0 0.0
    %455 = vmatprep.subr.mxu0 0.0
    %456 = vmatpush1.msra.mxu0 0.0
    %457 = vmatprep.subr.mxu0 0.0
    %458 = vmatpush1.msra.mxu0 0.0
    %459 = vmatprep.subr.mxu0 0.0
    %460 = vmatpush1.msra.mxu0 0.0
    %461 = vmatprep.subr.mxu0 0.0
    %462 = vmatpush1.msra.mxu0 0.0
    %463 = vmatprep.subr.mxu0 0.0
    %464 = vmatpush1.msra.mxu0 0.0
    %465 = vmatprep.mubr.f32.mxu0 0.0
    %466 = vmatmul.mubr.f32.gmra.mrb[0].mxu0 %v212
    %v467 = vpop.f32.mrb[0].mxu0
    %v468 = vadd.f32 %v393, %v467
    %v469 = vpop.f32.mrb[0].mxu0
    %470 = vmatprep.mubr.f32.mxu0 0.0
    %471 = vmatmul.mubr.f32.gmra.mrb[0].mxu0 %v215
    %v472 = vpop.f32.mrb[0].mxu0
    %v473 = vadd.f32 %v394, %v472
    %v474 = vpop.f32.mrb[0].mxu0
    %475 = vmatprep.mubr.f32.mxu0 0.0
    %476 = vmatmul.mubr.f32.gmra.mrb[0].mxu0 %v218
    %v477 = vpop.f32.mrb[0].mxu0
    %v478 = vadd.f32 %v395, %v477
    %v479 = vpop.f32.mrb[0].mxu0
    %480 = vmatprep.mubr.f32.mxu0 0.0
    %481 = vmatmul.mubr.f32.gmra.mrb[0].mxu0 %v221
    %v482 = vpop.f32.mrb[0].mxu0
    %v483 = vadd.f32 %v396, %v482
    %v484 = vpop.f32.mrb[0].mxu0
    %485 = vmatprep.mubr.f32.mxu0 0.0
    %486 = vmatmul.mubr.f32.gmra.mrb[0].mxu0 %v224
    %v487 = vpop.f32.mrb[0].mxu0
    %v488 = vadd.f32 %v397, %v487
    %v489 = vpop.f32.mrb[0].mxu0
    %490 = vmatprep.mubr.f32.mxu0 0.0
    %491 = vmatmul.mubr.f32.gmra.mrb[0].mxu0 %v227
    %v492 = vpop.f32.mrb[0].mxu0
    %v493 = vadd.f32 %v398, %v492
    %v494 = vpop.f32.mrb[0].mxu0
    %495 = vmatprep.mubr.f32.mxu0 0.0
    %496 = vmatmul.mubr.f32.gmra.mrb[0].mxu0 %v230
    %v497 = vpop.f32.mrb[0].mxu0
    %v498 = vadd.f32 %v399, %v497
    %v499 = vpop.f32.mrb[0].mxu0
    %500 = vmatprep.mubr.f32.mxu0 0.0
    %501 = vmatmul.mubr.f32.gmra.mrb[0].mxu0 %v233
    %v502 = vpop.f32.mrb[0].mxu0
    %v503 = vadd.f32 %v400, %v502
    %v504 = vpop.f32.mrb[0].mxu0
    %505 = vdwg.mxu0
    %v506 = vmul.f32 %v468, 0.5
    %v507 = vmul.f32 %v473, 0.5
    %v508 = vtanh.pop %v506
    %v509 = vtanh.pop %v507
    %v510 = vmul.f32 %v508, 0.5
    %v511 = vmul.f32 %v509, 0.5
    %v512 = vadd.f32 %v510, 0.5
    %v513 = vadd.f32 %v511, 0.5
    %v514 = vmul.f32 %v478, 0.5
    %v515 = vmul.f32 %v483, 0.5
    %v516 = vtanh.pop %v514
    %v517 = vtanh.pop %v515
    %v518 = vmul.f32 %v516, 0.5
    %v519 = vmul.f32 %v517, 0.5
    %v520 = vadd.f32 %v518, 0.5
    %v521 = vadd.f32 %v519, 0.5
    %v522 = vtanh.pop %v488
    %v523 = vtanh.pop %v493
    %v524 = vmul.f32 %v498, 0.5
    %v525 = vmul.f32 %v503, 0.5
    %v526 = vtanh.pop %v524
    %v527 = vtanh.pop %v525
    %v528 = vmul.f32 %v526, 0.5
    %v529 = vmul.f32 %v527, 0.5
    %v530 = vadd.f32 %v528, 0.5
    %v531 = vadd.f32 %v529, 0.5
    %v532 = vmul.f32 %v520, %v370
    %v533 = vmul.f32 %v521, %v371
    %v534 = vmul.f32 %v512, %v522
    %v535 = vmul.f32 %v513, %v523
    %v536 = vadd.f32 %v532, %v534
    %v537 = vadd.f32 %v533, %v535
    %v538 = vtanh.pop %v536
    %v539 = vtanh.pop %v537
    %v540 = vmul.f32 %v530, %v538
    %v541 = vmul.f32 %v531, %v539
    %v542 = vmul.f32 %v540, %v139
    %v543 = vmul.f32 %v541, %v144
    %v544 = vadd.f32 %v378, %v542
    %v545 = vadd.f32 %v379, %v543
    %v546 = vadd.f32 %v544, %v545
    %v547 = vrot.slane %v546, 4
    %v548 = vadd.f32 %v546, %v547
    %v549 = vrot.slane %v548, 2
    %v550 = vadd.f32 %v548, %v549
    %v551 = vrot.slane %v550, 1
    %v552 = vadd.f32 %v550, %v551
    %s553 = sld [smem:[#allocation2]]
    %v554 = vstv %s553
    %v555 = vadd.f32 %v552, %v554
    %556 = vst [vmem:[#allocation3] sm:$0x1] %v555
    // Predicated region
    $region22: #{tpu_custom_call.1} parent=1 // pred_check
      _
    $region23: #{tpu_custom_call.1} parent=1 // pred_check_branch
      %558 = sbr.rel (0) target = $region25
    $region24: #{tpu_custom_call.1} parent=1 // pred_region
      %s560 = ssub.s32 16, 16
      %561 = vsyncadd [#allocation4], %s560
      %s563 = sshll.u32 [#allocation3], 4
      %s564 = int_to_ptr.vmem [resolvable:$true] %s563
      %566 = dma.vmem_to_hbm [thread:$0]  %s564, 16, %s5, [#allocation4]
    $region25: #{tpu_custom_call.1} parent=1 // pred_fallthru
      _
    // Predicated region
    $region26: #{tpu_custom_call.1} parent=1 // pred_check
      _
    $region27: #{tpu_custom_call.1} parent=1 // pred_check_branch
      %568 = sbr.rel (0) target = $region29
    $region28: #{tpu_custom_call.1} parent=1 // pred_region
      %569 = dma.done [#allocation4], 16
    $region29: #{tpu_custom_call.1} parent=1 // pred_fallthru
      _
    %570 = vsyncpa [#allocation4], 1

</llo_original>
